<compile_context>
chip_gen: v7x
topology: tpu7x:2x2x1
jax: 0.10.0
libtpu: 0.0.40
codegen_flags: <defaults>
</compile_context>

<pallas_src>
import functools
import math

import jax
import jax.numpy as jnp
from jax import lax
from jax.experimental import pallas as pl
from jax.experimental.pallas import tpu as pltpu


def _round_up(a, m):
    return ((a + m - 1) // m) * m


def _convnet_kernel(x_ref, w_ref, b_ref, sel_ref, o_ref, *, sub_b):
    # x_ref:   (TB, 8, 64)    VMEM -- batch block; channels on sublanes, 64 spatial lanes
    # w_ref:   (8, 128)       VMEM -- fused conv weights: w1 in lanes 0..63, w2 in 64..127
    # b_ref:   (1, 128)       VMEM -- fused biases, same lane layout
    # sel_ref: (128, 64)      VMEM -- 0/1 selector: col c<32 picks x1[2c], c>=32 picks x1[2(c-32)+1]
    # o_ref:   (TB, 32, 128)  VMEM -- lane-dense outer products: row r = [x1[2r]*x2 | x1[2r+1]*x2]
    tb, C, hw = x_ref.shape
    hw2 = 2 * hw
    half = hw // 2
    nsub = tb // sub_b

    # Hoisted loop invariants (broadcast_in_dim is not CSE'd -> broadcast once per grid step).
    wf = jnp.broadcast_to(w_ref[...][None], (sub_b, C, hw2))     # (sub_b, 8, 128)
    bf = jnp.broadcast_to(b_ref[...], (sub_b, hw2))              # (sub_b, 128)
    sel = sel_ref[...]                                           # (128, 64)

    def body(s, carry):
        i0 = pl.multiple_of(s * sub_b, sub_b)
        xc = x_ref[pl.ds(i0, sub_b)]                             # (sub_b, 8, 64)
        xcc = jnp.concatenate([xc, xc], axis=-1)                 # (sub_b, 8, 128)
        # Fused 1x1 convs: ONE VPU mul + ONE cross-sublane reduce -> [x1 | x2] per batch row.
        x12 = jnp.sum(xcc * wf, axis=1) + bf                     # (sub_b, 128)
        x2 = x12[:, hw:]                                         # (sub_b, 64)  conv2 output
        # Even/odd conv1 values via an exact 0/1 selection matmul (MXU, otherwise idle).
        eo = jnp.dot(x12, sel, preferred_element_type=jnp.float32)   # (sub_b, 64) = [x1_even | x1_odd]
        # Outer products; lane concat gives the lane-dense (sub_b, 32, 128) tile whose row r
        # covers flat output elements 128*r .. 128*r+127 (i.e. i = 2r and i = 2r+1).
        out_e = eo[:, :half, None] * x2[:, None, :]              # (sub_b, 32, 64)
        out_o = eo[:, half:, None] * x2[:, None, :]              # (sub_b, 32, 64)
        o_ref[pl.ds(i0, sub_b)] = jnp.concatenate(
            [out_e, out_o], axis=-1).astype(o_ref.dtype)
        return carry

    lax.fori_loop(0, nsub, body, 0, unroll=2)


def convnet_forward(x_nchw, w1, b1, w2, b2, *, block_b=512, sub_b=8,
                    out_dtype=jnp.float32):
    """x_nchw: (B, 8, H, W) with H*W == 64.  Returns (B, 4096) in out_dtype."""
    B, C, H, W = x_nchw.shape
    HW = H * W
    assert C == 8 and HW == 64, "ConvNet expects 8 input channels on an 8x8 board"
    f32 = jnp.float32

    # Free reshape (no transpose / no extra HBM round trip): (B, C, 64).
    x = x_nchw.reshape(B, C, HW).astype(f32)

    # Batch tiling: tb is always a multiple of sub_b; for small/medium B use ~half the
    # batch per block so the "parallel" grid has >= 2 steps (v7x has 2 TensorCores).
    sub = max(1, int(sub_b))
    cap = max(sub, (int(block_b) // sub) * sub)
    half_b = _round_up(max(1, (B + 1) // 2), sub)
    tb = min(cap, half_b)
    num_blocks = -(-B // tb)
    Bp = num_blocks * tb
    if Bp != B:
        # Pad the batch so the grid is exact; padded rows are sliced off below.
        x = jnp.pad(x, ((0, Bp - B), (0, 0), (0, 0)))

    # Pre-fused, lane-dense conv weights (8, 128) and biases (1, 128):
    # w1/b1 occupy lanes 0..63, w2/b2 occupy lanes 64..127.
    w1v = w1.reshape(C).astype(f32)
    w2v = w2.reshape(C).astype(f32)
    wf = jnp.concatenate([jnp.tile(w1v[:, None], (1, HW)),
                          jnp.tile(w2v[:, None], (1, HW))], axis=1)          # (8, 128)
    bf = jnp.concatenate([jnp.full((1, HW), b1.reshape(()).astype(f32)),
                          jnp.full((1, HW), b2.reshape(()).astype(f32))],
                         axis=1)                                             # (1, 128)

    # Constant even/odd selection matrix (exact 0/1 entries): column c < 32 picks lane 2c
    # (even conv1 rows), column c >= 32 picks lane 2(c-32)+1 (odd conv1 rows).
    k = jnp.arange(2 * HW)[:, None]
    c = jnp.arange(HW)[None, :]
    sel = (((c < HW // 2) & (k == 2 * c)) |
           ((c >= HW // 2) & (k == 2 * (c - HW // 2) + 1))).astype(f32)      # (128, 64)

    kernel = functools.partial(_convnet_kernel, sub_b=sub)

    # Raise the scoped-VMEM limit explicitly (v5e default is 16 MiB; block_b=512
    # double-buffers ~18 MiB of in+out blocks).
    in_bytes = tb * C * HW * 4
    out_bytes = tb * (HW // 2) * (2 * HW) * 4
    vmem_limit = max(32 * 1024 * 1024,
                     2 * (in_bytes + out_bytes) + 4 * 1024 * 1024)
    vmem_limit = min(vmem_limit, 100 * 1024 * 1024)

    out = pl.pallas_call(
        kernel,
        out_shape=jax.ShapeDtypeStruct((Bp, HW // 2, 2 * HW), out_dtype),
        grid_spec=pltpu.PrefetchScalarGridSpec(
            num_scalar_prefetch=0,
            grid=(num_blocks,),
            in_specs=[
                pl.BlockSpec((tb, C, HW), lambda i: (i, 0, 0)),
                pl.BlockSpec((C, 2 * HW), lambda i: (0, 0)),
                pl.BlockSpec((1, 2 * HW), lambda i: (0, 0)),
                pl.BlockSpec((2 * HW, HW), lambda i: (0, 0)),
            ],
            out_specs=pl.BlockSpec((tb, HW // 2, 2 * HW), lambda i: (i, 0, 0)),
        ),
        compiler_params=pltpu.CompilerParams(
            dimension_semantics=("parallel",),
            vmem_limit_bytes=int(vmem_limit)),
    )(x, wf, bf, sel)

    # (Bp, 32, 128) is memory-contiguous with (Bp, 4096): slicing + reshape below is free.
    return out[:B].reshape(B, HW * HW)


def convnet_reference(x_nchw, w1, b1, w2, b2):
    """Pure-JAX f32 reference matching the PyTorch forward (VPU-only, no MXU rounding)."""
    B, C = x_nchw.shape[0], x_nchw.shape[1]
    x = x_nchw.astype(jnp.float32)
    x1 = jnp.sum(x * w1.reshape(1, C, 1, 1).astype(jnp.float32), axis=1) \
        + b1.reshape(()).astype(jnp.float32)
    x2 = jnp.sum(x * w2.reshape(1, C, 1, 1).astype(jnp.float32), axis=1) \
        + b2.reshape(()).astype(jnp.float32)
    x1f = x1.reshape(B, 64, 1)
    x2f = x2.reshape(B, 1, 64)
    return (x1f * x2f).reshape(B, -1)


if __name__ == "__main__":
    key = jax.random.PRNGKey(0)
    kx, kw1, kb1, kw2, kb2 = jax.random.split(key, 5)

    B, C, H, W = 32, 8, 8, 8
    x = jax.random.normal(kx, (B, C, H, W), dtype=jnp.float32)

    # Conv parameters per nn.Conv2d(8, 1, kernel_size=1): weight (1,8,1,1), bias (1,).
    bound = 1.0 / math.sqrt(8.0)
    w1 = jax.random.uniform(kw1, (1, C, 1, 1), jnp.float32, -bound, bound)
    b1 = jax.random.uniform(kb1, (1,), jnp.float32, -bound, bound)
    w2 = jax.random.uniform(kw2, (1, C, 1, 1), jnp.float32, -bound, bound)
    b2 = jax.random.uniform(kb2, (1,), jnp.float32, -bound, bound)

    ref = convnet_reference(x, w1, b1, w2, b2)

    # Small blocks so the tiny demo batch exercises a multi-step grid and a
    # multi-iteration (unrolled) inner loop.
    out_small = convnet_forward(x, w1, b1, w2, b2, block_b=8, sub_b=4)
    out_small = jax.block_until_ready(out_small)
    assert out_small.shape == (B, 4096)
    assert jnp.allclose(out_small, ref, atol=1e-5, rtol=1e-5)

    # Default (production) tiling path: tb = ceil(B/2) -> 2 parallel grid steps.
    out_default = convnet_forward(x, w1, b1, w2, b2)
    out_default = jax.block_until_ready(out_default)
    assert out_default.shape == (B, 4096)
    assert jnp.allclose(out_default, ref, atol=1e-5, rtol=1e-5)

    print("KERNEL_OK")
</pallas_src>

<mosaic_0001>
module attributes {stable_mosaic.version = 11 : i64} {
  func.func @_convnet_kernel(%arg0: i32, %arg1: memref<8x8x64xf32, #tpu.memory_space<vmem>>, %arg2: memref<8x128xf32, #tpu.memory_space<vmem>>, %arg3: memref<1x128xf32, #tpu.memory_space<vmem>>, %arg4: memref<128x64xf32, #tpu.memory_space<vmem>>, %arg5: memref<8x32x128xf32, #tpu.memory_space<vmem>>) attributes {dimension_semantics = [#tpu.dimension_semantics<parallel>], iteration_bounds = array<i64: 4>, scalar_prefetch = 0 : i64, scratch_operands = 0 : i64, tpu.core_type = #tpu.core_type<tc>, window_params = [{transform_indices = @transform_0, window_bounds = array<i64: 8, 8, 64>}, {pipeline_mode = #tpu.pipeline_mode<synchronous>, transform_indices = @transform_1, window_bounds = array<i64: 8, 128>}, {pipeline_mode = #tpu.pipeline_mode<synchronous>, transform_indices = @transform_2, window_bounds = array<i64: 1, 128>}, {pipeline_mode = #tpu.pipeline_mode<synchronous>, transform_indices = @transform_3, window_bounds = array<i64: 128, 64>}, {transform_indices = @transform_4, window_bounds = array<i64: 8, 32, 128>}]} {
    %c0 = arith.constant 0 : index
    %c0_0 = arith.constant 0 : index
    %0 = vector.load %arg2[%c0, %c0_0] : memref<8x128xf32, #tpu.memory_space<vmem>>, vector<8x128xf32>
    %1 = vector.shape_cast %0 : vector<8x128xf32> to vector<1x8x128xf32>
    %2 = vector.shape_cast %1 : vector<1x8x128xf32> to vector<1x8x128xf32>
    %3 = vector.broadcast %2 : vector<1x8x128xf32> to vector<4x8x128xf32>
    %c0_1 = arith.constant 0 : index
    %c0_2 = arith.constant 0 : index
    %4 = vector.load %arg3[%c0_1, %c0_2] : memref<1x128xf32, #tpu.memory_space<vmem>>, vector<1x128xf32>
    %5 = vector.shape_cast %4 : vector<1x128xf32> to vector<1x128xf32>
    %6 = vector.broadcast %5 : vector<1x128xf32> to vector<4x128xf32>
    %c0_3 = arith.constant 0 : index
    %c0_4 = arith.constant 0 : index
    %7 = vector.load %arg4[%c0_3, %c0_4] : memref<128x64xf32, #tpu.memory_space<vmem>>, vector<128x64xf32>
    %c0_i32 = arith.constant 0 : i32
    %c4_i32 = arith.constant 4 : i32
    %8 = arith.muli %c0_i32, %c4_i32 : i32
    %9 = tpu.assume_multiple %8, 4 : i32
    %10 = arith.index_cast %9 : i32 to index
    %c0_5 = arith.constant 0 : index
    %c0_6 = arith.constant 0 : index
    %11 = vector.load %arg1[%10, %c0_5, %c0_6] : memref<8x8x64xf32, #tpu.memory_space<vmem>>, vector<4x8x64xf32>
    %12 = tpu.concatenate %11, %11 in 2 : vector<4x8x64xf32>, vector<4x8x64xf32> -> vector<4x8x128xf32>
    %13 = arith.mulf %12, %3 : vector<4x8x128xf32>
    %cst = arith.constant dense<0.000000e+00> : vector<4x128xf32>
    %14 = vector.multi_reduction <add>, %13, %cst [1] : vector<4x8x128xf32> to vector<4x128xf32>
    %15 = arith.addf %14, %6 : vector<4x128xf32>
    %16 = vector.extract_strided_slice %15 {offsets = [0, 64], sizes = [4, 64], strides = [1, 1]} : vector<4x128xf32> to vector<4x64xf32>
    %cst_7 = arith.constant dense<0.000000e+00> : vector<4x64xf32>
    %17 = tpu.matmul %15, %7, %cst_7 {dimension_numbers = #tpu.dot_dimension_numbers<[1], [0], [0], [1], [0, 0, 1, 1], [], []>} : vector<4x128xf32>, vector<128x64xf32>, vector<4x64xf32> -> vector<4x64xf32>
    %18 = vector.extract_strided_slice %17 {offsets = [0, 0], sizes = [4, 32], strides = [1, 1]} : vector<4x64xf32> to vector<4x32xf32>
    %19 = vector.shape_cast %18 : vector<4x32xf32> to vector<4x32x1xf32>
    %20 = vector.shape_cast %16 : vector<4x64xf32> to vector<4x1x64xf32>
    %21 = vector.broadcast %19 : vector<4x32x1xf32> to vector<4x32x64xf32>
    %22 = vector.broadcast %20 : vector<4x1x64xf32> to vector<4x32x64xf32>
    %23 = arith.mulf %21, %22 : vector<4x32x64xf32>
    %24 = vector.extract_strided_slice %17 {offsets = [0, 32], sizes = [4, 32], strides = [1, 1]} : vector<4x64xf32> to vector<4x32xf32>
    %25 = vector.shape_cast %24 : vector<4x32xf32> to vector<4x32x1xf32>
    %26 = vector.shape_cast %16 : vector<4x64xf32> to vector<4x1x64xf32>
    %27 = vector.broadcast %25 : vector<4x32x1xf32> to vector<4x32x64xf32>
    %28 = vector.broadcast %26 : vector<4x1x64xf32> to vector<4x32x64xf32>
    %29 = arith.mulf %27, %28 : vector<4x32x64xf32>
    %30 = tpu.concatenate %23, %29 in 2 : vector<4x32x64xf32>, vector<4x32x64xf32> -> vector<4x32x128xf32>
    %31 = arith.index_cast %9 : i32 to index
    %c0_8 = arith.constant 0 : index
    %c0_9 = arith.constant 0 : index
    %32 = vector.load %arg5[%31, %c0_8, %c0_9] : memref<8x32x128xf32, #tpu.memory_space<vmem>>, vector<4x32x128xf32>
    tpu.vector_store %arg5[%31, %c0_8, %c0_9], %30 {strides = array<i32>} : memref<8x32x128xf32, #tpu.memory_space<vmem>>, vector<4x32x128xf32>,
    %c1_i32 = arith.constant 1 : i32
    %c4_i32_10 = arith.constant 4 : i32
    %33 = arith.muli %c1_i32, %c4_i32_10 : i32
    %34 = tpu.assume_multiple %33, 4 : i32
    %35 = arith.index_cast %34 : i32 to index
    %c0_11 = arith.constant 0 : index
    %c0_12 = arith.constant 0 : index
    %36 = vector.load %arg1[%35, %c0_11, %c0_12] : memref<8x8x64xf32, #tpu.memory_space<vmem>>, vector<4x8x64xf32>
    %37 = tpu.concatenate %36, %36 in 2 : vector<4x8x64xf32>, vector<4x8x64xf32> -> vector<4x8x128xf32>
    %38 = arith.mulf %37, %3 : vector<4x8x128xf32>
    %cst_13 = arith.constant dense<0.000000e+00> : vector<4x128xf32>
    %39 = vector.multi_reduction <add>, %38, %cst_13 [1] : vector<4x8x128xf32> to vector<4x128xf32>
    %40 = arith.addf %39, %6 : vector<4x128xf32>
    %41 = vector.extract_strided_slice %40 {offsets = [0, 64], sizes = [4, 64], strides = [1, 1]} : vector<4x128xf32> to vector<4x64xf32>
    %cst_14 = arith.constant dense<0.000000e+00> : vector<4x64xf32>
    %42 = tpu.matmul %40, %7, %cst_14 {dimension_numbers = #tpu.dot_dimension_numbers<[1], [0], [0], [1], [0, 0, 1, 1], [], []>} : vector<4x128xf32>, vector<128x64xf32>, vector<4x64xf32> -> vector<4x64xf32>
    %43 = vector.extract_strided_slice %42 {offsets = [0, 0], sizes = [4, 32], strides = [1, 1]} : vector<4x64xf32> to vector<4x32xf32>
    %44 = vector.shape_cast %43 : vector<4x32xf32> to vector<4x32x1xf32>
    %45 = vector.shape_cast %41 : vector<4x64xf32> to vector<4x1x64xf32>
    %46 = vector.broadcast %44 : vector<4x32x1xf32> to vector<4x32x64xf32>
    %47 = vector.broadcast %45 : vector<4x1x64xf32> to vector<4x32x64xf32>
    %48 = arith.mulf %46, %47 : vector<4x32x64xf32>
    %49 = vector.extract_strided_slice %42 {offsets = [0, 32], sizes = [4, 32], strides = [1, 1]} : vector<4x64xf32> to vector<4x32xf32>
    %50 = vector.shape_cast %49 : vector<4x32xf32> to vector<4x32x1xf32>
    %51 = vector.shape_cast %41 : vector<4x64xf32> to vector<4x1x64xf32>
    %52 = vector.broadcast %50 : vector<4x32x1xf32> to vector<4x32x64xf32>
    %53 = vector.broadcast %51 : vector<4x1x64xf32> to vector<4x32x64xf32>
    %54 = arith.mulf %52, %53 : vector<4x32x64xf32>
    %55 = tpu.concatenate %48, %54 in 2 : vector<4x32x64xf32>, vector<4x32x64xf32> -> vector<4x32x128xf32>
    %56 = arith.index_cast %34 : i32 to index
    %c0_15 = arith.constant 0 : index
    %c0_16 = arith.constant 0 : index
    %57 = vector.load %arg5[%56, %c0_15, %c0_16] : memref<8x32x128xf32, #tpu.memory_space<vmem>>, vector<4x32x128xf32>
    tpu.vector_store %arg5[%56, %c0_15, %c0_16], %55 {strides = array<i32>} : memref<8x32x128xf32, #tpu.memory_space<vmem>>, vector<4x32x128xf32>,
    %c2_i32 = arith.constant 2 : i32
    return
  }
  func.func @transform_0(%arg0: i32) -> (i32, i32, i32) {
    %c0_i32 = arith.constant 0 : i32
    %c0_i32_0 = arith.constant 0 : i32
    %c0_i32_1 = arith.constant 0 : i32
    return %arg0, %c0_i32, %c0_i32_0 : i32, i32, i32
  }
  func.func @transform_1(%arg0: i32) -> (i32, i32) {
    %c0_i32 = arith.constant 0 : i32
    %c0_i32_0 = arith.constant 0 : i32
    %c0_i32_1 = arith.constant 0 : i32
    return %c0_i32, %c0_i32_0 : i32, i32
  }
  func.func @transform_2(%arg0: i32) -> (i32, i32) {
    %c0_i32 = arith.constant 0 : i32
    %c0_i32_0 = arith.constant 0 : i32
    %c0_i32_1 = arith.constant 0 : i32
    return %c0_i32, %c0_i32_0 : i32, i32
  }
  func.func @transform_3(%arg0: i32) -> (i32, i32) {
    %c0_i32 = arith.constant 0 : i32
    %c0_i32_0 = arith.constant 0 : i32
    %c0_i32_1 = arith.constant 0 : i32
    return %c0_i32, %c0_i32_0 : i32, i32
  }
  func.func @transform_4(%arg0: i32) -> (i32, i32, i32) {
    %c0_i32 = arith.constant 0 : i32
    %c0_i32_0 = arith.constant 0 : i32
    %c0_i32_1 = arith.constant 0 : i32
    return %arg0, %c0_i32, %c0_i32_0 : i32, i32, i32
  }
}

</mosaic_0001>

<llo_original>
// kernel: tpu_custom_call.1
$region0: #{tpu_custom_call.1}
  #allocation0 [shape = 'u32[]', space=smem, size = 0x4, offset = 0x4, fixed_abs, tag = 'smem constant byte address 0x4 - core index']
  #allocation1 [shape = 'u32[144,128]{1,0:T(1,128)}', space=vmem, size = 0x12000, scoped, tag = 'internal scratch']
  %s0 = inlined_call_operand.hbm [shape: f32[32,8,64], index: 0, kind: input, shape index: {}]
  %s1 = inlined_call_operand.vmem [shape: f32[8,128], index: 1, kind: input, shape index: {}]
  %s2 = inlined_call_operand.vmem [shape: f32[1,128], index: 2, kind: input, shape index: {}]
  %s3 = inlined_call_operand.vmem [shape: f32[128,64], index: 3, kind: input, shape index: {}]
  %s4 = inlined_call_operand.hbm [shape: f32[32,32,128], index: 4, kind: output, shape index: {}]
  %s5 = sld [smem:[#allocation0]]
  $region53: #{tpu_custom_call.1} parent=0
    _
  %s7 = ssub.s32 1, %s5
  %s8 = scalar_select 0, %s7, %s5
  $region1: #{tpu_custom_call.1} parent=0
    #allocation2 [shape = 'u8[65536]{0}', space=vmem, size = 0x10000, scoped, tag = 'input window, operand 0']
    #allocation3 [shape = 's32[2]{0}', space=sflag, size = 0x8, scoped, tag = 'scoped memory for tpu_custom_call.1']
    #allocation4 [shape = 's32[2]{0}', space=sflag, size = 0x8, scoped, tag = 'scoped memory for tpu_custom_call.1']
    #allocation5 [shape = 'u8[262144]{0}', space=vmem, size = 0x40000, scoped, tag = 'output window, operand 0']
    %9 = vsyncpa [#allocation3], 0
    %s10 = scalar_lea.sflag [#allocation3], 1
    %11 = vsyncpa %s10, 0
    %12 = vsyncpa [#allocation4], 0
    %s13 = scalar_lea.sflag [#allocation4], 1
    %14 = vsyncpa %s13, 0
    loop: start=0, step=1, limit=6
    $region2: #{tpu_custom_call.1} parent=1 // loop_pre_header
      _
    $region3: #{tpu_custom_call.1} parent=1 // loop_header
      %s16 = sphi 0, %s20
      %p17 = scmp.ge.s32.totalorder %s16, 6
      %s26 = sphi 0, %s28
      %s29 = sphi 0, %s26
      %s30 = sphi 0, %s29
      %s46 = sphi 0, %s30
      %s50 = sphi 0, %s50
      %s52 = sphi 0, %s50
      %s53 = sphi 0, %s52
      %s67 = sphi 0, %s53
      %s71 = sphi 0, %s71
      %s73 = sphi 0, %s71
      %s74 = sphi 0, %s73
      %s88 = sphi 0, %s74
      %s92 = sphi 0, %s92
      %s94 = sphi 0, %s92
      %s95 = sphi 0, %s94
      %s109 = sphi 0, %s95
      %s115 = sphi 0, %s117
      %s118 = sphi 0, %s115
      %s119 = sphi 0, %s118
      %s135 = sphi 0, %s119
    $region4: #{tpu_custom_call.1} parent=1 // loop_header_branch
      %19 = sbr.rel (%p17) target = $region8
    $region5: #{tpu_custom_call.1} parent=1 // loop_body
      %s21 = ssub.s32 %s16, 1
      %s22 = ssub.s32 %s16, 2
      %s23 = sadd.s32 %s16, 1
      %s24 = ssub.s32 %s16, %s23
      %p25 = scmp.eq.s32.totalorder %s24, 0
      %s27 = sadd.s32 %s26, 1
      %s28 = scalar_select %p25, %s26, %s27
      %p31 = pneg %p25
      %p32 = scmp.eq.s32.totalorder %s16, 3
      %p33 = por %p31, %p32
      %p34 = scmp.ne.s32.totalorder %s26, %s29
      %p35 = scmp.eq.s32.totalorder %s16, 0
      %p36 = por %p34, %p35
      %p37 = scmp.ne.s32.totalorder %s26, %s29
      %p38 = scmp.eq.s32.totalorder %s21, 3
      %p39 = por %p37, %p38
      %p40 = scmp.ne.s32.totalorder %s29, %s30
      %p41 = scmp.eq.s32.totalorder %s21, 0
      %p42 = por %p40, %p41
      %p43 = scmp.ne.s32.totalorder %s29, %s30
      %p44 = scmp.eq.s32.totalorder %s22, 3
      %p45 = por %p43, %p44
      %p47 = scmp.ne.s32.totalorder %s30, %s46
      %p48 = scmp.eq.s32.totalorder %s22, 0
      %p49 = por %p47, %p48
      %s51 = sadd.s32 %s50, 1
      %p54 = scmp.eq.s32.totalorder %s16, 3
      %p55 = scmp.ne.s32.totalorder %s50, %s52
      %p56 = scmp.eq.s32.totalorder %s16, 0
      %p57 = por %p55, %p56
      %p58 = scmp.ne.s32.totalorder %s50, %s52
      %p59 = scmp.eq.s32.totalorder %s21, 3
      %p60 = por %p58, %p59
      %p61 = scmp.ne.s32.totalorder %s52, %s53
      %p62 = scmp.eq.s32.totalorder %s21, 0
      %p63 = por %p61, %p62
      %p64 = scmp.ne.s32.totalorder %s52, %s53
      %p65 = scmp.eq.s32.totalorder %s22, 3
      %p66 = por %p64, %p65
      %p68 = scmp.ne.s32.totalorder %s53, %s67
      %p69 = scmp.eq.s32.totalorder %s22, 0
      %p70 = por %p68, %p69
      %s72 = sadd.s32 %s71, 1
      %p75 = scmp.eq.s32.totalorder %s16, 3
      %p76 = scmp.ne.s32.totalorder %s71, %s73
      %p77 = scmp.eq.s32.totalorder %s16, 0
      %p78 = por %p76, %p77
      %p79 = scmp.ne.s32.totalorder %s71, %s73
      %p80 = scmp.eq.s32.totalorder %s21, 3
      %p81 = por %p79, %p80
      %p82 = scmp.ne.s32.totalorder %s73, %s74
      %p83 = scmp.eq.s32.totalorder %s21, 0
      %p84 = por %p82, %p83
      %p85 = scmp.ne.s32.totalorder %s73, %s74
      %p86 = scmp.eq.s32.totalorder %s22, 3
      %p87 = por %p85, %p86
      %p89 = scmp.ne.s32.totalorder %s74, %s88
      %p90 = scmp.eq.s32.totalorder %s22, 0
      %p91 = por %p89, %p90
      %s93 = sadd.s32 %s92, 1
      %p96 = scmp.eq.s32.totalorder %s16, 3
      %p97 = scmp.ne.s32.totalorder %s92, %s94
      %p98 = scmp.eq.s32.totalorder %s16, 0
      %p99 = por %p97, %p98
      %p100 = scmp.ne.s32.totalorder %s92, %s94
      %p101 = scmp.eq.s32.totalorder %s21, 3
      %p102 = por %p100, %p101
      %p103 = scmp.ne.s32.totalorder %s94, %s95
      %p104 = scmp.eq.s32.totalorder %s21, 0
      %p105 = por %p103, %p104
      %p106 = scmp.ne.s32.totalorder %s94, %s95
      %p107 = scmp.eq.s32.totalorder %s22, 3
      %p108 = por %p106, %p107
      %p110 = scmp.ne.s32.totalorder %s95, %s109
      %p111 = scmp.eq.s32.totalorder %s22, 0
      %p112 = por %p110, %p111
      %s113 = ssub.s32 %s16, %s23
      %p114 = scmp.eq.s32.totalorder %s113, 0
      %s116 = sadd.s32 %s115, 1
      %s117 = scalar_select %p114, %s115, %s116
      %p120 = pneg %p114
      %p121 = scmp.eq.s32.totalorder %s16, 3
      %p122 = por %p120, %p121
      %p123 = scmp.ne.s32.totalorder %s115, %s118
      %p124 = scmp.eq.s32.totalorder %s16, 0
      %p125 = por %p123, %p124
      %p126 = scmp.ne.s32.totalorder %s115, %s118
      %p127 = scmp.eq.s32.totalorder %s21, 3
      %p128 = por %p126, %p127
      %p129 = scmp.ne.s32.totalorder %s118, %s119
      %p130 = scmp.eq.s32.totalorder %s21, 0
      %p131 = por %p129, %p130
      %p132 = scmp.ne.s32.totalorder %s118, %s119
      %p133 = scmp.eq.s32.totalorder %s22, 3
      %p134 = por %p132, %p133
      %p136 = scmp.ne.s32.totalorder %s119, %s135
      %p137 = scmp.eq.s32.totalorder %s22, 0
      %p138 = por %p136, %p137
      %p139 = scmp.le.s32.totalorder 1, %s16
      %p140 = scmp.lt.s32.totalorder %s16, 5
      %p141 = pnand %p139, %p140
      %p142 = pneg %p141
      // Predicated region
      $region9: #{tpu_custom_call.1} parent=5 // pred_check
        _
      $region10: #{tpu_custom_call.1} parent=5 // pred_check_branch
        %144 = sbr.rel (%p141) target = $region12
      $region11: #{tpu_custom_call.1} parent=5 // pred_region
        %s145 = ssub.s32 %s16, 1
        // Predicated region
        $region13: #{tpu_custom_call.1} parent=11 // pred_check
          %p146 = pneg %p63
        $region14: #{tpu_custom_call.1} parent=11 // pred_check_branch
          %148 = sbr.rel (%p146) target = $region16
        $region15: #{tpu_custom_call.1} parent=11 // pred_region
          _
        $region16: #{tpu_custom_call.1} parent=11 // pred_fallthru
          _
        // Predicated region
        $region17: #{tpu_custom_call.1} parent=11 // pred_check
          %p149 = pneg %p84
        $region18: #{tpu_custom_call.1} parent=11 // pred_check_branch
          %151 = sbr.rel (%p149) target = $region20
        $region19: #{tpu_custom_call.1} parent=11 // pred_region
          _
        $region20: #{tpu_custom_call.1} parent=11 // pred_fallthru
          _
        // Predicated region
        $region21: #{tpu_custom_call.1} parent=11 // pred_check
          %p152 = pneg %p105
        $region22: #{tpu_custom_call.1} parent=11 // pred_check_branch
          %154 = sbr.rel (%p152) target = $region24
        $region23: #{tpu_custom_call.1} parent=11 // pred_region
          _
        $region24: #{tpu_custom_call.1} parent=11 // pred_fallthru
          _
      $region12: #{tpu_custom_call.1} parent=5 // pred_fallthru
        _
      %p155 = scmp.lt.s32.totalorder %s16, 4
      // Predicated region
      $region25: #{tpu_custom_call.1} parent=5 // pred_check
        %p156 = pneg %p155
      $region26: #{tpu_custom_call.1} parent=5 // pred_check_branch
        %158 = sbr.rel (%p156) target = $region28
      $region27: #{tpu_custom_call.1} parent=5 // pred_region
        // Predicated region
        $region29: #{tpu_custom_call.1} parent=27 // pred_check
          %p159 = pneg %p36
        $region30: #{tpu_custom_call.1} parent=27 // pred_check_branch
          %161 = sbr.rel (%p159) target = $region32
        $region31: #{tpu_custom_call.1} parent=27 // pred_region
          %s162 = sand.u32 %s26, 1
          %s163 = scalar_lea.sflag [#allocation3], %s162
          %s164 = sand.u32 %s26, 1
          %s165 = smul.addr %s164, 64
          %s166 = scalar_lea.vmem [#allocation2], %s165
          %s167 = smul.u32 8, %s16
          %s169 = ssub.s32 1024, 1024
          %170 = vsyncadd %s163, %s169
          %s171 = smul.addr %s167, 128
          %s172 = scalar_lea.hbm %s0, %s171
          %s173 = sshll.u32 %s166, 4
          %s174 = int_to_ptr.vmem [resolvable:$true] %s173
          %179 = dma.hbm_to_vmem [thread:$0]  %s172, 1024, %s174, %s163, 128, 128, 8
        $region32: #{tpu_custom_call.1} parent=27 // pred_fallthru
          _
      $region28: #{tpu_custom_call.1} parent=5 // pred_fallthru
        _
      %p180 = scmp.le.s32.totalorder 1, %s16
      %p181 = scmp.lt.s32.totalorder %s16, 5
      %p182 = pnand %p180, %p181
      %p183 = pneg %p182
      // Predicated region
      $region33: #{tpu_custom_call.1} parent=5 // pred_check
        _
      $region34: #{tpu_custom_call.1} parent=5 // pred_check_branch
        %185 = sbr.rel (%p182) target = $region36
      $region35: #{tpu_custom_call.1} parent=5 // pred_region
        %s186 = ssub.s32 %s16, 1
        %s187 = sand.u32 %s29, 1
        %s188 = scalar_lea.sflag [#allocation3], %s187
        %s189 = sand.u32 %s29, 1
        %s190 = smul.addr %s189, 64
        %s191 = scalar_lea.vmem [#allocation2], %s190
        // Predicated region
        $region37: #{tpu_custom_call.1} parent=35 // pred_check
          %p192 = pneg %p42
        $region38: #{tpu_custom_call.1} parent=35 // pred_check_branch
          %194 = sbr.rel (%p192) target = $region40
        $region39: #{tpu_custom_call.1} parent=35 // pred_region
          %195 = dma.done %s188, 1024
        $region40: #{tpu_custom_call.1} parent=35 // pred_fallthru
          _
        %s196 = sand.u32 %s29, 1
        %s197 = scalar_lea.sflag [#allocation3], %s196
        %s198 = sand.u32 %s29, 1
        %s199 = smul.addr %s198, 64
        %s200 = scalar_lea.vmem [#allocation2], %s199
        %p201 = pneg %p42
        %p202 = pneg %p39
        %p203 = pneg %p63
        %p204 = pneg %p60
        %p205 = pneg %p84
        %p206 = pneg %p81
        %p207 = pneg %p105
        %p208 = pneg %p102
        %p209 = pneg %p131
        %p210 = pneg %p128
        %s211 = sand.u32 %s118, 1
        %s212 = scalar_lea.sflag [#allocation4], %s211
        %s213 = sand.u32 %s118, 1
        %s214 = smul.addr %s213, 256
        %s215 = scalar_lea.vmem [#allocation5], %s214
        %s216 = smul.u32 8, %s21
        %s217 = smul.u32 8, %s21
        %v218 = vld [vmem:[%s1] sm:$0xff]
        %v219 = vld [vmem:[%s2] sm:$0x1]
        %v221 = vlaneseq
        %v222 = vshrl.u32 %v221, 7
        %v223 = vsub.s32 0, %v222
        %v224 = vrot.slane %v219, %v223
        %v226 = vld [vmem:[%s3] sm:$0xff]
        %v227 = vld [vmem:[%s3 + $0x8] sm:$0xff]
        %v228 = vld [vmem:[%s3 + $0x10] sm:$0xff]
        %v229 = vld [vmem:[%s3 + $0x18] sm:$0xff]
        %v230 = vld [vmem:[%s3 + $0x20] sm:$0xff]
        %v231 = vld [vmem:[%s3 + $0x28] sm:$0xff]
        %v232 = vld [vmem:[%s3 + $0x30] sm:$0xff]
        %v233 = vld [vmem:[%s3 + $0x38] sm:$0xff]
        %v234 = vld [vmem:[%s3 + $0x40] sm:$0xff]
        %v235 = vld [vmem:[%s3 + $0x48] sm:$0xff]
        %v236 = vld [vmem:[%s3 + $0x50] sm:$0xff]
        %v237 = vld [vmem:[%s3 + $0x58] sm:$0xff]
        %v238 = vld [vmem:[%s3 + $0x60] sm:$0xff]
        %v239 = vld [vmem:[%s3 + $0x68] sm:$0xff]
        %v240 = vld [vmem:[%s3 + $0x70] sm:$0xff]
        %v241 = vld [vmem:[%s3 + $0x78] sm:$0xff]
        %s242 = smul.u32 0, 8
        %s243 = scalar_lea.vmem %s191, %s242 [#allocation2]
        %v244 = vld [vmem:[%s243] sm:$0xff]
        %v245 = vld [vmem:[%s243 + $0x8] sm:$0xff]
        %v246 = vld [vmem:[%s243 + $0x10] sm:$0xff]
        %v247 = vld [vmem:[%s243 + $0x18] sm:$0xff]
        %252 = vrot.lane.b32.xlu0 %v244, 64
        %v253 = vpop.permute.xlu0 %252
        %254 = vrot.lane.b32.xlu0 %v245, 64
        %v255 = vpop.permute.xlu0 %254
        %256 = vrot.lane.b32.xlu0 %v246, 64
        %v257 = vpop.permute.xlu0 %256
        %258 = vrot.lane.b32.xlu0 %v247, 64
        %v259 = vpop.permute.xlu0 %258
        %vm264 = vcmask 523264
        %v265 = vsel %vm264, %v244, %v253
        %v266 = vsel %vm264, %v245, %v255
        %v267 = vsel %vm264, %v246, %v257
        %v268 = vsel %vm264, %v247, %v259
        %v269 = vmul.f32 %v265, %v218
        %v270 = vmul.f32 %v266, %v218
        %v271 = vmul.f32 %v267, %v218
        %v272 = vmul.f32 %v268, %v218
        %v273 = vrot.slane %v269, 4
        %v274 = vadd.f32 %v269, %v273
        %v275 = vrot.slane %v274, 2
        %v276 = vadd.f32 %v274, %v275
        %v277 = vrot.slane %v276, 1
        %v278 = vadd.f32 %v276, %v277
        %v279 = vrot.slane %v270, 4
        %v280 = vadd.f32 %v270, %v279
        %v281 = vrot.slane %v280, 2
        %v282 = vadd.f32 %v280, %v281
        %v283 = vrot.slane %v282, 1
        %v284 = vadd.f32 %v282, %v283
        %v285 = vrot.slane %v271, 4
        %v286 = vadd.f32 %v271, %v285
        %v287 = vrot.slane %v286, 2
        %v288 = vadd.f32 %v286, %v287
        %v289 = vrot.slane %v288, 1
        %v290 = vadd.f32 %v288, %v289
        %v291 = vrot.slane %v272, 4
        %v292 = vadd.f32 %v272, %v291
        %v293 = vrot.slane %v292, 2
        %v294 = vadd.f32 %v292, %v293
        %v295 = vrot.slane %v294, 1
        %v296 = vadd.f32 %v294, %v295
        %v297 = vadd.f32 %v278, %v224
        %v298 = vadd.f32 %v284, %v224
        %v299 = vadd.f32 %v290, %v224
        %v300 = vadd.f32 %v296, %v224
        %v305 = vrot.slane %v298, 7
        %vm306 = vcmask 1041409
        %v307 = vsel %vm306, %v305, %v297
        %v308 = vrot.slane %v299, 6
        %vm309 = vcmask 1042434
        %v310 = vsel %vm309, %v308, %v307
        %v311 = vrot.slane %v300, 5
        %vm312 = vcmask 1043459
        %v313 = vsel %vm312, %v311, %v310
        %315 = vmatprep.subr.mxu0 0.0
        %316 = vmatpush1.msra.mxu0 %v226
        %317 = vmatprep.subr.mxu0 0.0
        %318 = vmatpush1.msra.mxu0 %v227
        %319 = vmatprep.subr.mxu0 0.0
        %320 = vmatpush1.msra.mxu0 %v228
        %321 = vmatprep.subr.mxu0 0.0
        %322 = vmatpush1.msra.mxu0 %v229
        %323 = vmatprep.subr.mxu0 0.0
        %324 = vmatpush1.msra.mxu0 %v230
        %325 = vmatprep.subr.mxu0 0.0
        %326 = vmatpush1.msra.mxu0 %v231
        %327 = vmatprep.subr.mxu0 0.0
        %328 = vmatpush1.msra.mxu0 %v232
        %329 = vmatprep.subr.mxu0 0.0
        %330 = vmatpush1.msra.mxu0 %v233
        %331 = vmatprep.subr.mxu0 0.0
        %332 = vmatpush1.msra.mxu0 %v234
        %333 = vmatprep.subr.mxu0 0.0
        %334 = vmatpush1.msra.mxu0 %v235
        %335 = vmatprep.subr.mxu0 0.0
        %336 = vmatpush1.msra.mxu0 %v236
        %337 = vmatprep.subr.mxu0 0.0
        %338 = vmatpush1.msra.mxu0 %v237
        %339 = vmatprep.subr.mxu0 0.0
        %340 = vmatpush1.msra.mxu0 %v238
        %341 = vmatprep.subr.mxu0 0.0
        %342 = vmatpush1.msra.mxu0 %v239
        %343 = vmatprep.subr.mxu0 0.0
        %344 = vmatpush1.msra.mxu0 %v240
        %345 = vmatprep.subr.mxu0 0.0
        %346 = vmatpush1.msra.mxu0 %v241
        %347 = vmatprep.subr.mxu0 0.0
        %348 = vmatpush1.msra.mxu0 0.0
        %349 = vmatprep.subr.mxu0 0.0
        %350 = vmatpush1.msra.mxu0 0.0
        %351 = vmatprep.subr.mxu0 0.0
        %352 = vmatpush1.msra.mxu0 0.0
        %353 = vmatprep.subr.mxu0 0.0
        %354 = vmatpush1.msra.mxu0 0.0
        %355 = vmatprep.subr.mxu0 0.0
        %356 = vmatpush1.msra.mxu0 0.0
        %357 = vmatprep.subr.mxu0 0.0
        %358 = vmatpush1.msra.mxu0 0.0
        %359 = vmatprep.subr.mxu0 0.0
        %360 = vmatpush1.msra.mxu0 0.0
        %361 = vmatprep.subr.mxu0 0.0
        %362 = vmatpush1.msra.mxu0 0.0
        %363 = vmatprep.subr.mxu0 0.0
        %364 = vmatpush1.msra.mxu0 0.0
        %365 = vmatprep.subr.mxu0 0.0
        %366 = vmatpush1.msra.mxu0 0.0
        %367 = vmatprep.subr.mxu0 0.0
        %368 = vmatpush1.msra.mxu0 0.0
        %369 = vmatprep.subr.mxu0 0.0
        %370 = vmatpush1.msra.mxu0 0.0
        %371 = vmatprep.subr.mxu0 0.0
        %372 = vmatpush1.msra.mxu0 0.0
        %373 = vmatprep.subr.mxu0 0.0
        %374 = vmatpush1.msra.mxu0 0.0
        %375 = vmatprep.subr.mxu0 0.0
        %376 = vmatpush1.msra.mxu0 0.0
        %377 = vmatprep.subr.mxu0 0.0
        %378 = vmatpush1.msra.mxu0 0.0
        %379 = vmatprep.mubr.f32.mxu0 0.0
        %380 = vmatmul.mubr.f32.gmra.mrb[0].mxu0 %v313
        %v381 = vpop.f32.mrb[0].mxu0
        %v382 = vadd.f32 0.0, %v381
        %v383 = vpop.f32.mrb[0].mxu0
        %384 = vdwg.mxu0
        %v385 = vlaneseq
        %v386 = vshrl.u32 %v385, 7
        %v387 = vsub.s32 0, %v386
        %v388 = vrot.slane %v382, %v387
        %390 = vbcast.lane.b32.xlu0 %v388, 256
        %v391 = vpop.permute.xlu0 %390
        %s393 = sor.u32 256, 8
        %394 = vbcast.lane.b32.xlu0 %v388, %s393
        %v395 = vpop.permute.xlu0 %394
        %s397 = sor.u32 256, 16
        %398 = vbcast.lane.b32.xlu0 %v388, %s397
        %v399 = vpop.permute.xlu0 %398
        %s401 = sor.u32 256, 24
        %402 = vbcast.lane.b32.xlu0 %v388, %s401
        %v403 = vpop.permute.xlu0 %402
        %v404 = vlaneseq
        %v405 = vshrl.u32 %v404, 7
        %v406 = vsub.s32 1, %v405
        %v407 = vrot.slane %v382, %v406
        %409 = vbcast.lane.b32.xlu0 %v407, 256
        %v410 = vpop.permute.xlu0 %409
        %s412 = sor.u32 256, 8
        %413 = vbcast.lane.b32.xlu0 %v407, %s412
        %v414 = vpop.permute.xlu0 %413
        %s416 = sor.u32 256, 16
        %417 = vbcast.lane.b32.xlu0 %v407, %s416
        %v418 = vpop.permute.xlu0 %417
        %s420 = sor.u32 256, 24
        %421 = vbcast.lane.b32.xlu0 %v407, %s420
        %v422 = vpop.permute.xlu0 %421
        %v423 = vlaneseq
        %v424 = vshrl.u32 %v423, 7
        %v425 = vsub.s32 2, %v424
        %v426 = vrot.slane %v382, %v425
        %428 = vbcast.lane.b32.xlu0 %v426, 256
        %v429 = vpop.permute.xlu0 %428
        %s431 = sor.u32 256, 8
        %432 = vbcast.lane.b32.xlu0 %v426, %s431
        %v433 = vpop.permute.xlu0 %432
        %s435 = sor.u32 256, 16
        %436 = vbcast.lane.b32.xlu0 %v426, %s435
        %v437 = vpop.permute.xlu0 %436
        %s439 = sor.u32 256, 24
        %440 = vbcast.lane.b32.xlu0 %v426, %s439
        %v441 = vpop.permute.xlu0 %440
        %v442 = vlaneseq
        %v443 = vshrl.u32 %v442, 7
        %v444 = vsub.s32 3, %v443
        %v445 = vrot.slane %v382, %v444
        %447 = vbcast.lane.b32.xlu0 %v445, 256
        %v448 = vpop.permute.xlu0 %447
        %s450 = sor.u32 256, 8
        %451 = vbcast.lane.b32.xlu0 %v445, %s450
        %v452 = vpop.permute.xlu0 %451
        %s454 = sor.u32 256, 16
        %455 = vbcast.lane.b32.xlu0 %v445, %s454
        %v456 = vpop.permute.xlu0 %455
        %s458 = sor.u32 256, 24
        %459 = vbcast.lane.b32.xlu0 %v445, %s458
        %v460 = vpop.permute.xlu0 %459
        %v461 = vlaneseq
        %v462 = vshrl.u32 %v461, 7
        %v463 = vsub.s32 0, %v462
        %v464 = vrot.slane %v297, %v463
        %v465 = vlaneseq
        %v466 = vshrl.u32 %v465, 7
        %v467 = vsub.s32 0, %v466
        %v468 = vrot.slane %v298, %v467
        %v469 = vlaneseq
        %v470 = vshrl.u32 %v469, 7
        %v471 = vsub.s32 0, %v470
        %v472 = vrot.slane %v299, %v471
        %v473 = vlaneseq
        %v474 = vshrl.u32 %v473, 7
        %v475 = vsub.s32 0, %v474
        %v476 = vrot.slane %v300, %v475
        %v477 = vmul.f32 %v391, %v464
        %v478 = vmul.f32 %v395, %v464
        %v479 = vmul.f32 %v399, %v464
        %v480 = vmul.f32 %v403, %v464
        %v481 = vmul.f32 %v410, %v468
        %v482 = vmul.f32 %v414, %v468
        %v483 = vmul.f32 %v418, %v468
        %v484 = vmul.f32 %v422, %v468
        %v485 = vmul.f32 %v429, %v472
        %v486 = vmul.f32 %v433, %v472
        %v487 = vmul.f32 %v437, %v472
        %v488 = vmul.f32 %v441, %v472
        %v489 = vmul.f32 %v448, %v476
        %v490 = vmul.f32 %v452, %v476
        %v491 = vmul.f32 %v456, %v476
        %v492 = vmul.f32 %v460, %v476
        %s494 = sor.u32 256, 32
        %495 = vbcast.lane.b32.xlu0 %v388, %s494
        %v496 = vpop.permute.xlu0 %495
        %s498 = sor.u32 256, 40
        %499 = vbcast.lane.b32.xlu0 %v388, %s498
        %v500 = vpop.permute.xlu0 %499
        %s502 = sor.u32 256, 48
        %503 = vbcast.lane.b32.xlu0 %v388, %s502
        %v504 = vpop.permute.xlu0 %503
        %s506 = sor.u32 256, 56
        %507 = vbcast.lane.b32.xlu0 %v388, %s506
        %v508 = vpop.permute.xlu0 %507
        %s510 = sor.u32 256, 32
        %511 = vbcast.lane.b32.xlu0 %v407, %s510
        %v512 = vpop.permute.xlu0 %511
        %s514 = sor.u32 256, 40
        %515 = vbcast.lane.b32.xlu0 %v407, %s514
        %v516 = vpop.permute.xlu0 %515
        %s518 = sor.u32 256, 48
        %519 = vbcast.lane.b32.xlu0 %v407, %s518
        %v520 = vpop.permute.xlu0 %519
        %s522 = sor.u32 256, 56
        %523 = vbcast.lane.b32.xlu0 %v407, %s522
        %v524 = vpop.permute.xlu0 %523
        %s526 = sor.u32 256, 32
        %527 = vbcast.lane.b32.xlu0 %v426, %s526
        %v528 = vpop.permute.xlu0 %527
        %s530 = sor.u32 256, 40
        %531 = vbcast.lane.b32.xlu0 %v426, %s530
        %v532 = vpop.permute.xlu0 %531
        %s534 = sor.u32 256, 48
        %535 = vbcast.lane.b32.xlu0 %v426, %s534
        %v536 = vpop.permute.xlu0 %535
        %s538 = sor.u32 256, 56
        %539 = vbcast.lane.b32.xlu0 %v426, %s538
        %v540 = vpop.permute.xlu0 %539
        %s542 = sor.u32 256, 32
        %543 = vbcast.lane.b32.xlu0 %v445, %s542
        %v544 = vpop.permute.xlu0 %543
        %s546 = sor.u32 256, 40
        %547 = vbcast.lane.b32.xlu0 %v445, %s546
        %v548 = vpop.permute.xlu0 %547
        %s550 = sor.u32 256, 48
        %551 = vbcast.lane.b32.xlu0 %v445, %s550
        %v552 = vpop.permute.xlu0 %551
        %s554 = sor.u32 256, 56
        %555 = vbcast.lane.b32.xlu0 %v445, %s554
        %v556 = vpop.permute.xlu0 %555
        %v557 = vmul.f32 %v496, %v464
        %v558 = vmul.f32 %v500, %v464
        %v559 = vmul.f32 %v504, %v464
        %v560 = vmul.f32 %v508, %v464
        %v561 = vmul.f32 %v512, %v468
        %v562 = vmul.f32 %v516, %v468
        %v563 = vmul.f32 %v520, %v468
        %v564 = vmul.f32 %v524, %v468
        %v565 = vmul.f32 %v528, %v472
        %v566 = vmul.f32 %v532, %v472
        %v567 = vmul.f32 %v536, %v472
        %v568 = vmul.f32 %v540, %v472
        %v569 = vmul.f32 %v544, %v476
        %v570 = vmul.f32 %v548, %v476
        %v571 = vmul.f32 %v552, %v476
        %v572 = vmul.f32 %v556, %v476
        %589 = vrot.lane.b32.xlu0 %v477, 64
        %v590 = vpop.permute.xlu0 %589
        %591 = vrot.lane.b32.xlu0 %v478, 64
        %v592 = vpop.permute.xlu0 %591
        %593 = vrot.lane.b32.xlu0 %v479, 64
        %v594 = vpop.permute.xlu0 %593
        %595 = vrot.lane.b32.xlu0 %v480, 64
        %v596 = vpop.permute.xlu0 %595
        %597 = vrot.lane.b32.xlu0 %v481, 64
        %v598 = vpop.permute.xlu0 %597
        %599 = vrot.lane.b32.xlu0 %v482, 64
        %v600 = vpop.permute.xlu0 %599
        %601 = vrot.lane.b32.xlu0 %v483, 64
        %v602 = vpop.permute.xlu0 %601
        %603 = vrot.lane.b32.xlu0 %v484, 64
        %v604 = vpop.permute.xlu0 %603
        %605 = vrot.lane.b32.xlu0 %v485, 64
        %v606 = vpop.permute.xlu0 %605
        %607 = vrot.lane.b32.xlu0 %v486, 64
        %v608 = vpop.permute.xlu0 %607
        %609 = vrot.lane.b32.xlu0 %v487, 64
        %v610 = vpop.permute.xlu0 %609
        %611 = vrot.lane.b32.xlu0 %v488, 64
        %v612 = vpop.permute.xlu0 %611
        %613 = vrot.lane.b32.xlu0 %v489, 64
        %v614 = vpop.permute.xlu0 %613
        %615 = vrot.lane.b32.xlu0 %v490, 64
        %v616 = vpop.permute.xlu0 %615
        %617 = vrot.lane.b32.xlu0 %v491, 64
        %v618 = vpop.permute.xlu0 %617
        %619 = vrot.lane.b32.xlu0 %v492, 64
        %v620 = vpop.permute.xlu0 %619
        %v637 = vsel %vm264, %v590, %v557
        %v638 = vsel %vm264, %v592, %v558
        %v639 = vsel %vm264, %v594, %v559
        %v640 = vsel %vm264, %v596, %v560
        %v641 = vsel %vm264, %v598, %v561
        %v642 = vsel %vm264, %v600, %v562
        %v643 = vsel %vm264, %v602, %v563
        %v644 = vsel %vm264, %v604, %v564
        %v645 = vsel %vm264, %v606, %v565
        %v646 = vsel %vm264, %v608, %v566
        %v647 = vsel %vm264, %v610, %v567
        %v648 = vsel %vm264, %v612, %v568
        %v649 = vsel %vm264, %v614, %v569
        %v650 = vsel %vm264, %v616, %v570
        %v651 = vsel %vm264, %v618, %v571
        %v652 = vsel %vm264, %v620, %v572
        %s653 = smul.u32 0, 32
        %s654 = scalar_lea.vmem %s215, %s653 [#allocation5]
        %655 = vst [vmem:[%s654] sm:$0xff] %v637
        %656 = vst [vmem:[%s654 + $0x8] sm:$0xff] %v638
        %657 = vst [vmem:[%s654 + $0x10] sm:$0xff] %v639
        %658 = vst [vmem:[%s654 + $0x18] sm:$0xff] %v640
        %659 = vst [vmem:[%s654 + $0x20] sm:$0xff] %v641
        %660 = vst [vmem:[%s654 + $0x28] sm:$0xff] %v642
        %661 = vst [vmem:[%s654 + $0x30] sm:$0xff] %v643
        %662 = vst [vmem:[%s654 + $0x38] sm:$0xff] %v644
        %663 = vst [vmem:[%s654 + $0x40] sm:$0xff] %v645
        %664 = vst [vmem:[%s654 + $0x48] sm:$0xff] %v646
        %665 = vst [vmem:[%s654 + $0x50] sm:$0xff] %v647
        %666 = vst [vmem:[%s654 + $0x58] sm:$0xff] %v648
        %667 = vst [vmem:[%s654 + $0x60] sm:$0xff] %v649
        %668 = vst [vmem:[%s654 + $0x68] sm:$0xff] %v650
        %669 = vst [vmem:[%s654 + $0x70] sm:$0xff] %v651
        %670 = vst [vmem:[%s654 + $0x78] sm:$0xff] %v652
        %s671 = smul.u32 4, 8
        %s672 = scalar_lea.vmem %s191, %s671 [#allocation2]
        %v673 = vld [vmem:[%s672] sm:$0xff]
        %v674 = vld [vmem:[%s672 + $0x8] sm:$0xff]
        %v675 = vld [vmem:[%s672 + $0x10] sm:$0xff]
        %v676 = vld [vmem:[%s672 + $0x18] sm:$0xff]
        %681 = vrot.lane.b32.xlu0 %v673, 64
        %v682 = vpop.permute.xlu0 %681
        %683 = vrot.lane.b32.xlu0 %v674, 64
        %v684 = vpop.permute.xlu0 %683
        %685 = vrot.lane.b32.xlu0 %v675, 64
        %v686 = vpop.permute.xlu0 %685
        %687 = vrot.lane.b32.xlu0 %v676, 64
        %v688 = vpop.permute.xlu0 %687
        %v693 = vsel %vm264, %v673, %v682
        %v694 = vsel %vm264, %v674, %v684
        %v695 = vsel %vm264, %v675, %v686
        %v696 = vsel %vm264, %v676, %v688
        %v697 = vmul.f32 %v693, %v218
        %v698 = vmul.f32 %v694, %v218
        %v699 = vmul.f32 %v695, %v218
        %v700 = vmul.f32 %v696, %v218
        %v701 = vrot.slane %v697, 4
        %v702 = vadd.f32 %v697, %v701
        %v703 = vrot.slane %v702, 2
        %v704 = vadd.f32 %v702, %v703
        %v705 = vrot.slane %v704, 1
        %v706 = vadd.f32 %v704, %v705
        %v707 = vrot.slane %v698, 4
        %v708 = vadd.f32 %v698, %v707
        %v709 = vrot.slane %v708, 2
        %v710 = vadd.f32 %v708, %v709
        %v711 = vrot.slane %v710, 1
        %v712 = vadd.f32 %v710, %v711
        %v713 = vrot.slane %v699, 4
        %v714 = vadd.f32 %v699, %v713
        %v715 = vrot.slane %v714, 2
        %v716 = vadd.f32 %v714, %v715
        %v717 = vrot.slane %v716, 1
        %v718 = vadd.f32 %v716, %v717
        %v719 = vrot.slane %v700, 4
        %v720 = vadd.f32 %v700, %v719
        %v721 = vrot.slane %v720, 2
        %v722 = vadd.f32 %v720, %v721
        %v723 = vrot.slane %v722, 1
        %v724 = vadd.f32 %v722, %v723
        %v725 = vadd.f32 %v706, %v224
        %v726 = vadd.f32 %v712, %v224
        %v727 = vadd.f32 %v718, %v224
        %v728 = vadd.f32 %v724, %v224
        %v733 = vrot.slane %v726, 7
        %v734 = vsel %vm306, %v733, %v725
        %v735 = vrot.slane %v727, 6
        %v736 = vsel %vm309, %v735, %v734
        %v737 = vrot.slane %v728, 5
        %v738 = vsel %vm312, %v737, %v736
        %740 = vmatprep.subr.mxu0 0.0
        %741 = vmatpush1.msra.mxu0 %v226
        %742 = vmatprep.subr.mxu0 0.0
        %743 = vmatpush1.msra.mxu0 %v227
        %744 = vmatprep.subr.mxu0 0.0
        %745 = vmatpush1.msra.mxu0 %v228
        %746 = vmatprep.subr.mxu0 0.0
        %747 = vmatpush1.msra.mxu0 %v229
        %748 = vmatprep.subr.mxu0 0.0
        %749 = vmatpush1.msra.mxu0 %v230
        %750 = vmatprep.subr.mxu0 0.0
        %751 = vmatpush1.msra.mxu0 %v231
        %752 = vmatprep.subr.mxu0 0.0
        %753 = vmatpush1.msra.mxu0 %v232
        %754 = vmatprep.subr.mxu0 0.0
        %755 = vmatpush1.msra.mxu0 %v233
        %756 = vmatprep.subr.mxu0 0.0
        %757 = vmatpush1.msra.mxu0 %v234
        %758 = vmatprep.subr.mxu0 0.0
        %759 = vmatpush1.msra.mxu0 %v235
        %760 = vmatprep.subr.mxu0 0.0
        %761 = vmatpush1.msra.mxu0 %v236
        %762 = vmatprep.subr.mxu0 0.0
        %763 = vmatpush1.msra.mxu0 %v237
        %764 = vmatprep.subr.mxu0 0.0
        %765 = vmatpush1.msra.mxu0 %v238
        %766 = vmatprep.subr.mxu0 0.0
        %767 = vmatpush1.msra.mxu0 %v239
        %768 = vmatprep.subr.mxu0 0.0
        %769 = vmatpush1.msra.mxu0 %v240
        %770 = vmatprep.subr.mxu0 0.0
        %771 = vmatpush1.msra.mxu0 %v241
        %772 = vmatprep.subr.mxu0 0.0
        %773 = vmatpush1.msra.mxu0 0.0
        %774 = vmatprep.subr.mxu0 0.0
        %775 = vmatpush1.msra.mxu0 0.0
        %776 = vmatprep.subr.mxu0 0.0
        %777 = vmatpush1.msra.mxu0 0.0
        %778 = vmatprep.subr.mxu0 0.0
        %779 = vmatpush1.msra.mxu0 0.0
        %780 = vmatprep.subr.mxu0 0.0
        %781 = vmatpush1.msra.mxu0 0.0
        %782 = vmatprep.subr.mxu0 0.0
        %783 = vmatpush1.msra.mxu0 0.0
        %784 = vmatprep.subr.mxu0 0.0
        %785 = vmatpush1.msra.mxu0 0.0
        %786 = vmatprep.subr.mxu0 0.0
        %787 = vmatpush1.msra.mxu0 0.0
        %788 = vmatprep.subr.mxu0 0.0
        %789 = vmatpush1.msra.mxu0 0.0
        %790 = vmatprep.subr.mxu0 0.0
        %791 = vmatpush1.msra.mxu0 0.0
        %792 = vmatprep.subr.mxu0 0.0
        %793 = vmatpush1.msra.mxu0 0.0
        %794 = vmatprep.subr.mxu0 0.0
        %795 = vmatpush1.msra.mxu0 0.0
        %796 = vmatprep.subr.mxu0 0.0
        %797 = vmatpush1.msra.mxu0 0.0
        %798 = vmatprep.subr.mxu0 0.0
        %799 = vmatpush1.msra.mxu0 0.0
        %800 = vmatprep.subr.mxu0 0.0
        %801 = vmatpush1.msra.mxu0 0.0
        %802 = vmatprep.subr.mxu0 0.0
        %803 = vmatpush1.msra.mxu0 0.0
        %804 = vmatprep.mubr.f32.mxu0 0.0
        %805 = vmatmul.mubr.f32.gmra.mrb[0].mxu0 %v738
        %v806 = vpop.f32.mrb[0].mxu0
        %v807 = vadd.f32 0.0, %v806
        %v808 = vpop.f32.mrb[0].mxu0
        %809 = vdwg.mxu0
        %v810 = vlaneseq
        %v811 = vshrl.u32 %v810, 7
        %v812 = vsub.s32 0, %v811
        %v813 = vrot.slane %v807, %v812
        %815 = vbcast.lane.b32.xlu0 %v813, 256
        %v816 = vpop.permute.xlu0 %815
        %s818 = sor.u32 256, 8
        %819 = vbcast.lane.b32.xlu0 %v813, %s818
        %v820 = vpop.permute.xlu0 %819
        %s822 = sor.u32 256, 16
        %823 = vbcast.lane.b32.xlu0 %v813, %s822
        %v824 = vpop.permute.xlu0 %823
        %s826 = sor.u32 256, 24
        %827 = vbcast.lane.b32.xlu0 %v813, %s826
        %v828 = vpop.permute.xlu0 %827
        %v829 = vlaneseq
        %v830 = vshrl.u32 %v829, 7
        %v831 = vsub.s32 1, %v830
        %v832 = vrot.slane %v807, %v831
        %834 = vbcast.lane.b32.xlu0 %v832, 256
        %v835 = vpop.permute.xlu0 %834
        %s837 = sor.u32 256, 8
        %838 = vbcast.lane.b32.xlu0 %v832, %s837
        %v839 = vpop.permute.xlu0 %838
        %s841 = sor.u32 256, 16
        %842 = vbcast.lane.b32.xlu0 %v832, %s841
        %v843 = vpop.permute.xlu0 %842
        %s845 = sor.u32 256, 24
        %846 = vbcast.lane.b32.xlu0 %v832, %s845
        %v847 = vpop.permute.xlu0 %846
        %v848 = vlaneseq
        %v849 = vshrl.u32 %v848, 7
        %v850 = vsub.s32 2, %v849
        %v851 = vrot.slane %v807, %v850
        %853 = vbcast.lane.b32.xlu0 %v851, 256
        %v854 = vpop.permute.xlu0 %853
        %s856 = sor.u32 256, 8
        %857 = vbcast.lane.b32.xlu0 %v851, %s856
        %v858 = vpop.permute.xlu0 %857
        %s860 = sor.u32 256, 16
        %861 = vbcast.lane.b32.xlu0 %v851, %s860
        %v862 = vpop.permute.xlu0 %861
        %s864 = sor.u32 256, 24
        %865 = vbcast.lane.b32.xlu0 %v851, %s864
        %v866 = vpop.permute.xlu0 %865
        %v867 = vlaneseq
        %v868 = vshrl.u32 %v867, 7
        %v869 = vsub.s32 3, %v868
        %v870 = vrot.slane %v807, %v869
        %872 = vbcast.lane.b32.xlu0 %v870, 256
        %v873 = vpop.permute.xlu0 %872
        %s875 = sor.u32 256, 8
        %876 = vbcast.lane.b32.xlu0 %v870, %s875
        %v877 = vpop.permute.xlu0 %876
        %s879 = sor.u32 256, 16
        %880 = vbcast.lane.b32.xlu0 %v870, %s879
        %v881 = vpop.permute.xlu0 %880
        %s883 = sor.u32 256, 24
        %884 = vbcast.lane.b32.xlu0 %v870, %s883
        %v885 = vpop.permute.xlu0 %884
        %v886 = vlaneseq
        %v887 = vshrl.u32 %v886, 7
        %v888 = vsub.s32 0, %v887
        %v889 = vrot.slane %v725, %v888
        %v890 = vlaneseq
        %v891 = vshrl.u32 %v890, 7
        %v892 = vsub.s32 0, %v891
        %v893 = vrot.slane %v726, %v892
        %v894 = vlaneseq
        %v895 = vshrl.u32 %v894, 7
        %v896 = vsub.s32 0, %v895
        %v897 = vrot.slane %v727, %v896
        %v898 = vlaneseq
        %v899 = vshrl.u32 %v898, 7
        %v900 = vsub.s32 0, %v899
        %v901 = vrot.slane %v728, %v900
        %v902 = vmul.f32 %v816, %v889
        %v903 = vmul.f32 %v820, %v889
        %v904 = vmul.f32 %v824, %v889
        %v905 = vmul.f32 %v828, %v889
        %v906 = vmul.f32 %v835, %v893
        %v907 = vmul.f32 %v839, %v893
        %v908 = vmul.f32 %v843, %v893
        %v909 = vmul.f32 %v847, %v893
        %v910 = vmul.f32 %v854, %v897
        %v911 = vmul.f32 %v858, %v897
        %v912 = vmul.f32 %v862, %v897
        %v913 = vmul.f32 %v866, %v897
        %v914 = vmul.f32 %v873, %v901
        %v915 = vmul.f32 %v877, %v901
        %v916 = vmul.f32 %v881, %v901
        %v917 = vmul.f32 %v885, %v901
        %s919 = sor.u32 256, 32
        %920 = vbcast.lane.b32.xlu0 %v813, %s919
        %v921 = vpop.permute.xlu0 %920
        %s923 = sor.u32 256, 40
        %924 = vbcast.lane.b32.xlu0 %v813, %s923
        %v925 = vpop.permute.xlu0 %924
        %s927 = sor.u32 256, 48
        %928 = vbcast.lane.b32.xlu0 %v813, %s927
        %v929 = vpop.permute.xlu0 %928
        %s931 = sor.u32 256, 56
        %932 = vbcast.lane.b32.xlu0 %v813, %s931
        %v933 = vpop.permute.xlu0 %932
        %s935 = sor.u32 256, 32
        %936 = vbcast.lane.b32.xlu0 %v832, %s935
        %v937 = vpop.permute.xlu0 %936
        %s939 = sor.u32 256, 40
        %940 = vbcast.lane.b32.xlu0 %v832, %s939
        %v941 = vpop.permute.xlu0 %940
        %s943 = sor.u32 256, 48
        %944 = vbcast.lane.b32.xlu0 %v832, %s943
        %v945 = vpop.permute.xlu0 %944
        %s947 = sor.u32 256, 56
        %948 = vbcast.lane.b32.xlu0 %v832, %s947
        %v949 = vpop.permute.xlu0 %948
        %s951 = sor.u32 256, 32
        %952 = vbcast.lane.b32.xlu0 %v851, %s951
        %v953 = vpop.permute.xlu0 %952
        %s955 = sor.u32 256, 40
        %956 = vbcast.lane.b32.xlu0 %v851, %s955
        %v957 = vpop.permute.xlu0 %956
        %s959 = sor.u32 256, 48
        %960 = vbcast.lane.b32.xlu0 %v851, %s959
        %v961 = vpop.permute.xlu0 %960
        %s963 = sor.u32 256, 56
        %964 = vbcast.lane.b32.xlu0 %v851, %s963
        %v965 = vpop.permute.xlu0 %964
        %s967 = sor.u32 256, 32
        %968 = vbcast.lane.b32.xlu0 %v870, %s967
        %v969 = vpop.permute.xlu0 %968
        %s971 = sor.u32 256, 40
        %972 = vbcast.lane.b32.xlu0 %v870, %s971
        %v973 = vpop.permute.xlu0 %972
        %s975 = sor.u32 256, 48
        %976 = vbcast.lane.b32.xlu0 %v870, %s975
        %v977 = vpop.permute.xlu0 %976
        %s979 = sor.u32 256, 56
        %980 = vbcast.lane.b32.xlu0 %v870, %s979
        %v981 = vpop.permute.xlu0 %980
        %v982 = vmul.f32 %v921, %v889
        %v983 = vmul.f32 %v925, %v889
        %v984 = vmul.f32 %v929, %v889
        %v985 = vmul.f32 %v933, %v889
        %v986 = vmul.f32 %v937, %v893
        %v987 = vmul.f32 %v941, %v893
        %v988 = vmul.f32 %v945, %v893
        %v989 = vmul.f32 %v949, %v893
        %v990 = vmul.f32 %v953, %v897
        %v991 = vmul.f32 %v957, %v897
        %v992 = vmul.f32 %v961, %v897
        %v993 = vmul.f32 %v965, %v897
        %v994 = vmul.f32 %v969, %v901
        %v995 = vmul.f32 %v973, %v901
        %v996 = vmul.f32 %v977, %v901
        %v997 = vmul.f32 %v981, %v901
        %1014 = vrot.lane.b32.xlu0 %v902, 64
        %v1015 = vpop.permute.xlu0 %1014
        %1016 = vrot.lane.b32.xlu0 %v903, 64
        %v1017 = vpop.permute.xlu0 %1016
        %1018 = vrot.lane.b32.xlu0 %v904, 64
        %v1019 = vpop.permute.xlu0 %1018
        %1020 = vrot.lane.b32.xlu0 %v905, 64
        %v1021 = vpop.permute.xlu0 %1020
        %1022 = vrot.lane.b32.xlu0 %v906, 64
        %v1023 = vpop.permute.xlu0 %1022
        %1024 = vrot.lane.b32.xlu0 %v907, 64
        %v1025 = vpop.permute.xlu0 %1024
        %1026 = vrot.lane.b32.xlu0 %v908, 64
        %v1027 = vpop.permute.xlu0 %1026
        %1028 = vrot.lane.b32.xlu0 %v909, 64
        %v1029 = vpop.permute.xlu0 %1028
        %1030 = vrot.lane.b32.xlu0 %v910, 64
        %v1031 = vpop.permute.xlu0 %1030
        %1032 = vrot.lane.b32.xlu0 %v911, 64
        %v1033 = vpop.permute.xlu0 %1032
        %1034 = vrot.lane.b32.xlu0 %v912, 64
        %v1035 = vpop.permute.xlu0 %1034
        %1036 = vrot.lane.b32.xlu0 %v913, 64
        %v1037 = vpop.permute.xlu0 %1036
        %1038 = vrot.lane.b32.xlu0 %v914, 64
        %v1039 = vpop.permute.xlu0 %1038
        %1040 = vrot.lane.b32.xlu0 %v915, 64
        %v1041 = vpop.permute.xlu0 %1040
        %1042 = vrot.lane.b32.xlu0 %v916, 64
        %v1043 = vpop.permute.xlu0 %1042
        %1044 = vrot.lane.b32.xlu0 %v917, 64
        %v1045 = vpop.permute.xlu0 %1044
        %v1062 = vsel %vm264, %v1015, %v982
        %v1063 = vsel %vm264, %v1017, %v983
        %v1064 = vsel %vm264, %v1019, %v984
        %v1065 = vsel %vm264, %v1021, %v985
        %v1066 = vsel %vm264, %v1023, %v986
        %v1067 = vsel %vm264, %v1025, %v987
        %v1068 = vsel %vm264, %v1027, %v988
        %v1069 = vsel %vm264, %v1029, %v989
        %v1070 = vsel %vm264, %v1031, %v990
        %v1071 = vsel %vm264, %v1033, %v991
        %v1072 = vsel %vm264, %v1035, %v992
        %v1073 = vsel %vm264, %v1037, %v993
        %v1074 = vsel %vm264, %v1039, %v994
        %v1075 = vsel %vm264, %v1041, %v995
        %v1076 = vsel %vm264, %v1043, %v996
        %v1077 = vsel %vm264, %v1045, %v997
        %s1078 = smul.u32 4, 32
        %s1079 = scalar_lea.vmem %s215, %s1078 [#allocation5]
        %1080 = vst [vmem:[%s1079] sm:$0xff] %v1062
        %1081 = vst [vmem:[%s1079 + $0x8] sm:$0xff] %v1063
        %1082 = vst [vmem:[%s1079 + $0x10] sm:$0xff] %v1064
        %1083 = vst [vmem:[%s1079 + $0x18] sm:$0xff] %v1065
        %1084 = vst [vmem:[%s1079 + $0x20] sm:$0xff] %v1066
        %1085 = vst [vmem:[%s1079 + $0x28] sm:$0xff] %v1067
        %1086 = vst [vmem:[%s1079 + $0x30] sm:$0xff] %v1068
        %1087 = vst [vmem:[%s1079 + $0x38] sm:$0xff] %v1069
        %1088 = vst [vmem:[%s1079 + $0x40] sm:$0xff] %v1070
        %1089 = vst [vmem:[%s1079 + $0x48] sm:$0xff] %v1071
        %1090 = vst [vmem:[%s1079 + $0x50] sm:$0xff] %v1072
        %1091 = vst [vmem:[%s1079 + $0x58] sm:$0xff] %v1073
        %1092 = vst [vmem:[%s1079 + $0x60] sm:$0xff] %v1074
        %1093 = vst [vmem:[%s1079 + $0x68] sm:$0xff] %v1075
        %1094 = vst [vmem:[%s1079 + $0x70] sm:$0xff] %v1076
        %1095 = vst [vmem:[%s1079 + $0x78] sm:$0xff] %v1077
        %s1096 = sand.u32 %s118, 1
        %s1097 = scalar_lea.sflag [#allocation4], %s1096
        %s1098 = sand.u32 %s118, 1
        %s1099 = smul.addr %s1098, 256
        %s1100 = scalar_lea.vmem [#allocation5], %s1099
        // Predicated region
        $region41: #{tpu_custom_call.1} parent=35 // pred_check
          %p1101 = pneg %p128
        $region42: #{tpu_custom_call.1} parent=35 // pred_check_branch
          %1103 = sbr.rel (%p1101) target = $region44
        $region43: #{tpu_custom_call.1} parent=35 // pred_region
          %s1104 = smul.u32 8, %s21
          %s1106 = ssub.s32 4096, 4096
          %1107 = vsyncadd %s1097, %s1106
          %s1108 = smul.addr %s1104, 4
          %s1109 = smul.addr %s1108, 128
          %s1110 = scalar_lea.hbm %s4, %s1109
          %s1111 = sshll.u32 %s1100, 4
          %s1112 = int_to_ptr.vmem [resolvable:$true] %s1111
          %1117 = dma.vmem_to_hbm [thread:$0]  %s1112, 4096, %s1110, %s1097, 128, 128, 8
        $region44: #{tpu_custom_call.1} parent=35 // pred_fallthru
          _
      $region36: #{tpu_custom_call.1} parent=5 // pred_fallthru
        _
      %p1118 = scmp.le.s32.totalorder 2, %s16
      // Predicated region
      $region45: #{tpu_custom_call.1} parent=5 // pred_check
        %p1119 = pneg %p1118
      $region46: #{tpu_custom_call.1} parent=5 // pred_check_branch
        %1121 = sbr.rel (%p1119) target = $region48
      $region47: #{tpu_custom_call.1} parent=5 // pred_region
        %s1122 = ssub.s32 %s16, 2
        // Predicated region
        $region49: #{tpu_custom_call.1} parent=47 // pred_check
          %p1123 = pneg %p134
        $region50: #{tpu_custom_call.1} parent=47 // pred_check_branch
          %1125 = sbr.rel (%p1123) target = $region52
        $region51: #{tpu_custom_call.1} parent=47 // pred_region
          %s1126 = sand.u32 %s119, 1
          %s1127 = scalar_lea.sflag [#allocation4], %s1126
          %s1128 = sand.u32 %s119, 1
          %s1129 = smul.addr %s1128, 256
          %s1130 = scalar_lea.vmem [#allocation5], %s1129
          %1131 = dma.done %s1127, 4096
        $region52: #{tpu_custom_call.1} parent=47 // pred_fallthru
          _
      $region48: #{tpu_custom_call.1} parent=5 // pred_fallthru
        _
    $region6: #{tpu_custom_call.1} parent=1 // loop_footer
      %s20 = sadd.s32 1, %s16
    $region7: #{tpu_custom_call.1} parent=1 // loop_footer_branch
      %15 = sbr.rel target = $region3
    $region8: #{tpu_custom_call.1} parent=1 // loop_exit
      _
    %1132 = vsyncpa [#allocation3], 1
    %s1133 = scalar_lea.sflag [#allocation3], 1
    %1134 = vsyncpa %s1133, 1
    %1135 = vsyncpa [#allocation4], 1
    %s1136 = scalar_lea.sflag [#allocation4], 1
    %1137 = vsyncpa %s1136, 1

</llo_original>
